<compile_context>
chip_gen: v7x
topology: tpu7x:2x2x1
jax: 0.10.0
libtpu: 0.0.40
codegen_flags: <defaults>
</compile_context>

<pallas_src>
import functools

import jax
import jax.numpy as jnp
from jax.experimental import pallas as pl
from jax.experimental.pallas import tpu as pltpu

_LANE = 128     # last-dim (lane) granularity
_SUBLANE = 8    # second-to-last-dim (sublane) granularity
_TILE_B_CAP = 512          # per review: 128 -> 512 (per-step overhead amortization)
_WEIGHT_DB_BUDGET = 16 << 20   # double-buffered weight budget before Buffered(1)
_SCOPED_VMEM_DEFAULT = 32 << 20


def _round_up(x: int, m: int) -> int:
    return ((x + m - 1) // m) * m


def _cdiv(a: int, b: int) -> int:
    return -(-a // b)


def _fused_mlp_kernel(x_ref, *refs, num_linear: int):
    """Fused forward pass.

    refs = (w0, b0, w1, b1, ..., w_{L-1}, b_{L-1}, o_ref)
      w_i: bf16 [In_i, Out_pad_i]  (pre-transposed, zero-padded)
      b_i: f32  [1, Out_pad_i]
    All linears except the last get a fused ReLU (the last is the classifier).
    The running activation lives in vregs / compiler-managed VMEM — nothing
    touches HBM between layers. Matmuls run bf16 x bf16 -> f32 on the MXU;
    bias-add / ReLU epilogue stays in f32 (v5e VPU has no bf16 ALU).
    """
    o_ref = refs[-1]
    act = x_ref[...].astype(jnp.float32)
    for li in range(num_linear):
        w = refs[2 * li][...]          # bf16 [In_i, Out_pad_i]
        b = refs[2 * li + 1][...]      # f32  [1, Out_pad_i]
        acc = jnp.dot(act.astype(jnp.bfloat16), w,
                      preferred_element_type=jnp.float32)   # bf16 MXU, f32 acc
        act = acc + b                                        # f32 epilogue (VPU)
        if li < num_linear - 1:
            act = jnp.maximum(act, 0.0)                      # fused ReLU
    o_ref[...] = act.astype(o_ref.dtype)


class MLPPallas:
    """Mirrors the PyTorch MLP: Linear+ReLU blocks, then a Linear classifier."""

    def __init__(self, depth, num_class, key, dropout: bool = False,
                 drop_rate: float = 0.2):
        assert len(depth) > 0, "The configuration of the MLP cannot be empty"
        # TODO(synk): dropout is a no-op (inference semantics).
        self.dropout = dropout
        self.drop_rate = drop_rate
        self.num_class = num_class
        self.in_features = depth[0]

        dims = list(depth) + [num_class]          # hidden layers ... classifier
        self.raw_params = []                      # PyTorch-layout [Out, In] f32 (reference)
        self.padded_params = []                   # (bf16 [In_i, Out_pad_i], f32 [1, Out_pad_i])
        for li in range(1, len(dims)):
            fan_in, fan_out = dims[li - 1], dims[li]
            key, wk, bk = jax.random.split(key, 3)
            bound = 1.0 / (fan_in ** 0.5)
            w = jax.random.uniform(wk, (fan_out, fan_in), jnp.float32, -bound, bound)
            b = jax.random.uniform(bk, (fan_out,), jnp.float32, -bound, bound)
            self.raw_params.append((w, b))

            # Pre-transpose + pad ONCE, outside the hot path.
            #  - first layer: keep the TRUE input feature dim (no lane padding of x)
            #  - later layers: the K dim must match the previous layer's padded output
            in_dim = fan_in if li == 1 else _round_up(fan_in, _LANE)
            out_pad = _round_up(fan_out, _LANE)
            w_t = jnp.zeros((in_dim, out_pad), jnp.float32).at[:fan_in, :fan_out].set(w.T)
            w_t = w_t.astype(jnp.bfloat16)        # bf16 MXU operand (f32 acc in-kernel)
            b2 = jnp.zeros((1, out_pad), jnp.float32).at[:, :fan_out].set(b)
            self.padded_params.append((w_t, b2))

        self.num_linear = len(self.padded_params)
        self.out_pad = _round_up(num_class, _LANE)
        self.weight_bytes = sum(
            w.size * w.dtype.itemsize + b.size * b.dtype.itemsize
            for (w, b) in self.padded_params)

    def __call__(self, x):
        B, In = x.shape
        assert In == self.in_features

        # Batch tile selection: sublane-rounded, capped at 512; once the batch is
        # >= 16 rows, make sure the grid has >= 2 steps so ("parallel",) can shard
        # across both TensorCores on v7x.
        b_pad = _round_up(B, _SUBLANE)
        if b_pad >= 2 * _SUBLANE:
            tile_b = min(_TILE_B_CAP, _round_up(_cdiv(b_pad, 2), _SUBLANE))
        else:
            tile_b = b_pad
        b_pad = _round_up(b_pad, tile_b)

        # Only pad the ragged tail; when the batch already divides the tile there is
        # no host-side copy of x at all (the kernel streams x directly from HBM).
        if b_pad != B:
            x_in = jnp.zeros((b_pad, In), x.dtype).at[:B, :].set(x)
        else:
            x_in = x

        # Weights use constant index maps; by default Pallas double-buffers them.
        # Guard the fully-VMEM-resident strategy against the v7x budget (32 MiB
        # scoped / 64 MiB physical): single-buffer them if they get large.
        single_buffer_weights = (2 * self.weight_bytes) > _WEIGHT_DB_BUDGET

        def _const_spec(shape):
            if single_buffer_weights:
                return pl.BlockSpec(shape, lambda i: (0, 0),
                                    pipeline_mode=pl.Buffered(1))
            return pl.BlockSpec(shape, lambda i: (0, 0))

        flat_params = []
        in_specs = [pl.BlockSpec((tile_b, In), lambda i: (i, 0))]
        for w_t, b2 in self.padded_params:
            flat_params += [w_t, b2]
            in_specs.append(_const_spec(w_t.shape))
            in_specs.append(_const_spec(b2.shape))

        # Raise the scoped-VMEM limit only if the estimated footprint needs it.
        itemsize = jnp.dtype(x.dtype).itemsize
        io_bytes = 2 * tile_b * (In + self.out_pad) * itemsize   # double-buffered x/out
        w_bytes = self.weight_bytes * (1 if single_buffer_weights else 2)
        vmem_needed = io_bytes + w_bytes
        vmem_limit = None
        if vmem_needed > _SCOPED_VMEM_DEFAULT:
            vmem_limit = min(int(vmem_needed * 1.25), 100 << 20)

        kernel = functools.partial(_fused_mlp_kernel, num_linear=self.num_linear)
        out_p = pl.pallas_call(
            kernel,
            out_shape=jax.ShapeDtypeStruct((b_pad, self.out_pad), x.dtype),
            grid=(b_pad // tile_b,),
            in_specs=in_specs,
            # Lane-dense (128-wide) output on purpose: avoids masked vst.msk stores.
            out_specs=pl.BlockSpec((tile_b, self.out_pad), lambda i: (i, 0)),
            compiler_params=pltpu.CompilerParams(
                dimension_semantics=("parallel",),
                vmem_limit_bytes=vmem_limit),
        )(x_in, *flat_params)

        # Strip batch / class padding.
        return out_p[:B, :self.num_class]


if __name__ == "__main__":
    key = jax.random.PRNGKey(0)
    key, xkey, pkey = jax.random.split(key, 3)

    depth = [32, 64, 64]   # input features 32, two hidden layers of 64
    num_class = 10
    batch = 8

    model = MLPPallas(depth, num_class, pkey, dropout=False)
    x = jax.random.normal(xkey, (batch, depth[0]), jnp.float32)

    out = jax.block_until_ready(model(x))
    assert out.shape == (batch, num_class)

    n = len(model.raw_params)

    # 1) Tight check against a bf16-parity reference (same precision as the kernel:
    #    bf16 operands into the dot, f32 accumulation/epilogue).
    ref_bf16 = x
    for li, (w, b) in enumerate(model.raw_params):
        ref_bf16 = jnp.dot(ref_bf16.astype(jnp.bfloat16), w.T.astype(jnp.bfloat16),
                           preferred_element_type=jnp.float32) + b
        if li < n - 1:
            ref_bf16 = jnp.maximum(ref_bf16, 0.0)
    assert jnp.allclose(out, ref_bf16, atol=2e-3, rtol=2e-3)

    # 2) Loose check against the pure-f32 reference (bf16 MXU operands is a
    #    deliberate precision/speed tradeoff).
    ref_f32 = x
    for li, (w, b) in enumerate(model.raw_params):
        ref_f32 = ref_f32 @ w.T + b
        if li < n - 1:
            ref_f32 = jnp.maximum(ref_f32, 0.0)
    assert jnp.allclose(out, ref_f32, atol=1e-1, rtol=1e-1)

    print("KERNEL_OK")
</pallas_src>

<mosaic_0001>
module attributes {stable_mosaic.version = 11 : i64} {
  func.func @_fused_mlp_kernel(%arg0: i32, %arg1: memref<8x32xf32, #tpu.memory_space<vmem>>, %arg2: memref<32x128xbf16, #tpu.memory_space<vmem>>, %arg3: memref<1x128xf32, #tpu.memory_space<vmem>>, %arg4: memref<128x128xbf16, #tpu.memory_space<vmem>>, %arg5: memref<1x128xf32, #tpu.memory_space<vmem>>, %arg6: memref<128x128xbf16, #tpu.memory_space<vmem>>, %arg7: memref<1x128xf32, #tpu.memory_space<vmem>>, %arg8: memref<8x128xf32, #tpu.memory_space<vmem>>) attributes {dimension_semantics = [#tpu.dimension_semantics<parallel>], iteration_bounds = array<i64: 1>, scalar_prefetch = 0 : i64, scratch_operands = 0 : i64, tpu.core_type = #tpu.core_type<tc>, window_params = [{transform_indices = @transform_0, window_bounds = array<i64: 8, 32>}, {pipeline_mode = #tpu.pipeline_mode<synchronous>, transform_indices = @transform_1, window_bounds = array<i64: 32, 128>}, {pipeline_mode = #tpu.pipeline_mode<synchronous>, transform_indices = @transform_2, window_bounds = array<i64: 1, 128>}, {pipeline_mode = #tpu.pipeline_mode<synchronous>, transform_indices = @transform_3, window_bounds = array<i64: 128, 128>}, {pipeline_mode = #tpu.pipeline_mode<synchronous>, transform_indices = @transform_4, window_bounds = array<i64: 1, 128>}, {pipeline_mode = #tpu.pipeline_mode<synchronous>, transform_indices = @transform_5, window_bounds = array<i64: 128, 128>}, {pipeline_mode = #tpu.pipeline_mode<synchronous>, transform_indices = @transform_6, window_bounds = array<i64: 1, 128>}, {transform_indices = @transform_7, window_bounds = array<i64: 8, 128>}]} {
    %c0 = arith.constant 0 : index
    %c0_0 = arith.constant 0 : index
    %0 = vector.load %arg1[%c0, %c0_0] : memref<8x32xf32, #tpu.memory_space<vmem>>, vector<8x32xf32>
    %c0_1 = arith.constant 0 : index
    %c0_2 = arith.constant 0 : index
    %1 = vector.load %arg2[%c0_1, %c0_2] : memref<32x128xbf16, #tpu.memory_space<vmem>>, vector<32x128xbf16>
    %c0_3 = arith.constant 0 : index
    %c0_4 = arith.constant 0 : index
    %2 = vector.load %arg3[%c0_3, %c0_4] : memref<1x128xf32, #tpu.memory_space<vmem>>, vector<1x128xf32>
    %3 = arith.truncf %0 : vector<8x32xf32> to vector<8x32xbf16>
    %cst = arith.constant dense<0.000000e+00> : vector<8x128xf32>
    %4 = tpu.matmul %3, %1, %cst {dimension_numbers = #tpu.dot_dimension_numbers<[1], [0], [0], [1], [0, 0, 1, 1], [], []>} : vector<8x32xbf16>, vector<32x128xbf16>, vector<8x128xf32> -> vector<8x128xf32>
    %5 = vector.broadcast %2 : vector<1x128xf32> to vector<8x128xf32>
    %6 = arith.addf %4, %5 : vector<8x128xf32>
    %cst_5 = arith.constant 0.000000e+00 : f32
    %7 = vector.broadcast %cst_5 : f32 to vector<8x128xf32>
    %8 = arith.maximumf %6, %7 : vector<8x128xf32>
    %c0_6 = arith.constant 0 : index
    %c0_7 = arith.constant 0 : index
    %9 = vector.load %arg4[%c0_6, %c0_7] : memref<128x128xbf16, #tpu.memory_space<vmem>>, vector<128x128xbf16>
    %c0_8 = arith.constant 0 : index
    %c0_9 = arith.constant 0 : index
    %10 = vector.load %arg5[%c0_8, %c0_9] : memref<1x128xf32, #tpu.memory_space<vmem>>, vector<1x128xf32>
    %11 = arith.truncf %8 : vector<8x128xf32> to vector<8x128xbf16>
    %cst_10 = arith.constant dense<0.000000e+00> : vector<8x128xf32>
    %12 = tpu.matmul %11, %9, %cst_10 {dimension_numbers = #tpu.dot_dimension_numbers<[1], [0], [0], [1], [0, 0, 1, 1], [], []>} : vector<8x128xbf16>, vector<128x128xbf16>, vector<8x128xf32> -> vector<8x128xf32>
    %13 = vector.broadcast %10 : vector<1x128xf32> to vector<8x128xf32>
    %14 = arith.addf %12, %13 : vector<8x128xf32>
    %cst_11 = arith.constant 0.000000e+00 : f32
    %15 = vector.broadcast %cst_11 : f32 to vector<8x128xf32>
    %16 = arith.maximumf %14, %15 : vector<8x128xf32>
    %c0_12 = arith.constant 0 : index
    %c0_13 = arith.constant 0 : index
    %17 = vector.load %arg6[%c0_12, %c0_13] : memref<128x128xbf16, #tpu.memory_space<vmem>>, vector<128x128xbf16>
    %c0_14 = arith.constant 0 : index
    %c0_15 = arith.constant 0 : index
    %18 = vector.load %arg7[%c0_14, %c0_15] : memref<1x128xf32, #tpu.memory_space<vmem>>, vector<1x128xf32>
    %19 = arith.truncf %16 : vector<8x128xf32> to vector<8x128xbf16>
    %cst_16 = arith.constant dense<0.000000e+00> : vector<8x128xf32>
    %20 = tpu.matmul %19, %17, %cst_16 {dimension_numbers = #tpu.dot_dimension_numbers<[1], [0], [0], [1], [0, 0, 1, 1], [], []>} : vector<8x128xbf16>, vector<128x128xbf16>, vector<8x128xf32> -> vector<8x128xf32>
    %21 = vector.broadcast %18 : vector<1x128xf32> to vector<8x128xf32>
    %22 = arith.addf %20, %21 : vector<8x128xf32>
    %c0_17 = arith.constant 0 : index
    %c0_18 = arith.constant 0 : index
    %23 = vector.load %arg8[%c0_17, %c0_18] : memref<8x128xf32, #tpu.memory_space<vmem>>, vector<8x128xf32>
    tpu.vector_store %arg8[%c0_17, %c0_18], %22 {strides = array<i32>} : memref<8x128xf32, #tpu.memory_space<vmem>>, vector<8x128xf32>,
    return
  }
  func.func @transform_0(%arg0: i32) -> (i32, i32) {
    %c0_i32 = arith.constant 0 : i32
    %c0_i32_0 = arith.constant 0 : i32
    return %arg0, %c0_i32 : i32, i32
  }
  func.func @transform_1(%arg0: i32) -> (i32, i32) {
    %c0_i32 = arith.constant 0 : i32
    %c0_i32_0 = arith.constant 0 : i32
    %c0_i32_1 = arith.constant 0 : i32
    return %c0_i32, %c0_i32_0 : i32, i32
  }
  func.func @transform_2(%arg0: i32) -> (i32, i32) {
    %c0_i32 = arith.constant 0 : i32
    %c0_i32_0 = arith.constant 0 : i32
    %c0_i32_1 = arith.constant 0 : i32
    return %c0_i32, %c0_i32_0 : i32, i32
  }
  func.func @transform_3(%arg0: i32) -> (i32, i32) {
    %c0_i32 = arith.constant 0 : i32
    %c0_i32_0 = arith.constant 0 : i32
    %c0_i32_1 = arith.constant 0 : i32
    return %c0_i32, %c0_i32_0 : i32, i32
  }
  func.func @transform_4(%arg0: i32) -> (i32, i32) {
    %c0_i32 = arith.constant 0 : i32
    %c0_i32_0 = arith.constant 0 : i32
    %c0_i32_1 = arith.constant 0 : i32
    return %c0_i32, %c0_i32_0 : i32, i32
  }
  func.func @transform_5(%arg0: i32) -> (i32, i32) {
    %c0_i32 = arith.constant 0 : i32
    %c0_i32_0 = arith.constant 0 : i32
    %c0_i32_1 = arith.constant 0 : i32
    return %c0_i32, %c0_i32_0 : i32, i32
  }
  func.func @transform_6(%arg0: i32) -> (i32, i32) {
    %c0_i32 = arith.constant 0 : i32
    %c0_i32_0 = arith.constant 0 : i32
    %c0_i32_1 = arith.constant 0 : i32
    return %c0_i32, %c0_i32_0 : i32, i32
  }
  func.func @transform_7(%arg0: i32) -> (i32, i32) {
    %c0_i32 = arith.constant 0 : i32
    %c0_i32_0 = arith.constant 0 : i32
    return %arg0, %c0_i32 : i32, i32
  }
}

</mosaic_0001>

<llo_original>
// kernel: tpu_custom_call.1
$region0: #{tpu_custom_call.1}
  #allocation0 [shape = 'u32[]', space=smem, size = 0x4, offset = 0x4, fixed_abs, tag = 'smem constant byte address 0x4 - core index']
  #allocation1 [shape = 'u32[144,128]{1,0:T(1,128)}', space=vmem, size = 0x12000, scoped, tag = 'internal scratch']
  %s0 = inlined_call_operand.hbm [shape: f32[8,32], index: 0, kind: input, shape index: {}]
  %s1 = inlined_call_operand.hbm [shape: bf16[32,128], index: 1, kind: input, shape index: {}]
  %s2 = inlined_call_operand.vmem [shape: f32[1,128], index: 2, kind: input, shape index: {}]
  %s3 = inlined_call_operand.hbm [shape: bf16[128,128], index: 3, kind: input, shape index: {}]
  %s4 = inlined_call_operand.vmem [shape: f32[1,128], index: 4, kind: input, shape index: {}]
  %s5 = inlined_call_operand.hbm [shape: bf16[128,128], index: 5, kind: input, shape index: {}]
  %s6 = inlined_call_operand.vmem [shape: f32[1,128], index: 6, kind: input, shape index: {}]
  %s7 = inlined_call_operand.hbm [shape: f32[8,128], index: 7, kind: output, shape index: {}]
  %s8 = sld [smem:[#allocation0]]
  $region54: #{tpu_custom_call.1} parent=0
    _
  %s10 = ssub.s32 1, %s8
  %s11 = scalar_select 0, %s10, %s8
  $region1: #{tpu_custom_call.1} parent=0
    #allocation2 [shape = 'u8[4096]{0}', space=vmem, size = 0x1000, scoped, tag = 'input window, operand 0, single buffered']
    #allocation3 [shape = 's32[1]{0}', space=sflag, size = 0x4, scoped, tag = 'scoped memory for tpu_custom_call.1']
    #allocation4 [shape = 's32[1]{0}', space=sflag, size = 0x4, scoped, tag = 'scoped memory for tpu_custom_call.1']
    #allocation5 [shape = 'u8[8192]{0}', space=vmem, size = 0x2000, scoped, tag = 'input window, operand 1, single buffered']
    #allocation6 [shape = 's32[1]{0}', space=sflag, size = 0x4, scoped, tag = 'scoped memory for tpu_custom_call.1']
    #allocation7 [shape = 'u8[32768]{0}', space=vmem, size = 0x8000, scoped, tag = 'input window, operand 3, single buffered']
    #allocation8 [shape = 'u8[32768]{0}', space=vmem, size = 0x8000, scoped, tag = 'input window, operand 5, single buffered']
    #allocation9 [shape = 's32[1]{0}', space=sflag, size = 0x4, scoped, tag = 'scoped memory for tpu_custom_call.1']
    #allocation10 [shape = 'u8[4096]{0}', space=vmem, size = 0x1000, scoped, tag = 'output window, operand 0, single buffered']
    %12 = vsyncpa [#allocation3], 0
    %13 = vsyncpa [#allocation6], 0
    %14 = vsyncpa [#allocation9], 0
    %15 = vsyncpa [#allocation4], 0
    // Predicated region
    $region2: #{tpu_custom_call.1} parent=1 // pred_check
      _
    $region3: #{tpu_custom_call.1} parent=1 // pred_check_branch
      %17 = sbr.rel (0) target = $region5
    $region4: #{tpu_custom_call.1} parent=1 // pred_region
      %s19 = ssub.s32 128, 128
      %20 = vsyncadd [#allocation3], %s19
      %s22 = sshll.u32 [#allocation2], 4
      %s23 = int_to_ptr.vmem [resolvable:$true] %s22
      %25 = dma.hbm_to_vmem [thread:$0]  %s0, 128, %s23, [#allocation3]
    $region5: #{tpu_custom_call.1} parent=1 // pred_fallthru
      _
    // Predicated region
    $region6: #{tpu_custom_call.1} parent=1 // pred_check
      _
    $region7: #{tpu_custom_call.1} parent=1 // pred_check_branch
      %27 = sbr.rel (0) target = $region9
    $region8: #{tpu_custom_call.1} parent=1 // pred_region
      %s29 = ssub.s32 256, 256
      %30 = vsyncadd [#allocation6], %s29
      %s31 = sshll.u32 [#allocation5], 4
      %s32 = int_to_ptr.vmem [resolvable:$true] %s31
      %37 = dma.hbm_to_vmem [thread:$0]  %s1, 256, %s32, [#allocation6], 64, 64, 4
    $region9: #{tpu_custom_call.1} parent=1 // pred_fallthru
      _
    // Predicated region
    $region10: #{tpu_custom_call.1} parent=1 // pred_check
      _
    $region11: #{tpu_custom_call.1} parent=1 // pred_check_branch
      %39 = sbr.rel (0) target = $region13
    $region12: #{tpu_custom_call.1} parent=1 // pred_region
      _
    $region13: #{tpu_custom_call.1} parent=1 // pred_fallthru
      _
    // Predicated region
    $region14: #{tpu_custom_call.1} parent=1 // pred_check
      _
    $region15: #{tpu_custom_call.1} parent=1 // pred_check_branch
      %41 = sbr.rel (0) target = $region17
    $region16: #{tpu_custom_call.1} parent=1 // pred_region
      %s43 = ssub.s32 1024, 1024
      %44 = vsyncadd [#allocation6], %s43
      %s45 = sshll.u32 [#allocation7], 4
      %s46 = int_to_ptr.vmem [resolvable:$true] %s45
      %51 = dma.hbm_to_vmem [thread:$0]  %s3, 1024, %s46, [#allocation6], 64, 64, 4
    $region17: #{tpu_custom_call.1} parent=1 // pred_fallthru
      _
    // Predicated region
    $region18: #{tpu_custom_call.1} parent=1 // pred_check
      _
    $region19: #{tpu_custom_call.1} parent=1 // pred_check_branch
      %53 = sbr.rel (0) target = $region21
    $region20: #{tpu_custom_call.1} parent=1 // pred_region
      _
    $region21: #{tpu_custom_call.1} parent=1 // pred_fallthru
      _
    // Predicated region
    $region22: #{tpu_custom_call.1} parent=1 // pred_check
      _
    $region23: #{tpu_custom_call.1} parent=1 // pred_check_branch
      %55 = sbr.rel (0) target = $region25
    $region24: #{tpu_custom_call.1} parent=1 // pred_region
      %s57 = ssub.s32 1024, 1024
      %58 = vsyncadd [#allocation9], %s57
      %s59 = sshll.u32 [#allocation8], 4
      %s60 = int_to_ptr.vmem [resolvable:$true] %s59
      %65 = dma.hbm_to_vmem [thread:$0]  %s5, 1024, %s60, [#allocation9], 64, 64, 4
    $region25: #{tpu_custom_call.1} parent=1 // pred_fallthru
      _
    // Predicated region
    $region26: #{tpu_custom_call.1} parent=1 // pred_check
      _
    $region27: #{tpu_custom_call.1} parent=1 // pred_check_branch
      %67 = sbr.rel (0) target = $region29
    $region28: #{tpu_custom_call.1} parent=1 // pred_region
      _
    $region29: #{tpu_custom_call.1} parent=1 // pred_fallthru
      _
    // Predicated region
    $region30: #{tpu_custom_call.1} parent=1 // pred_check
      _
    $region31: #{tpu_custom_call.1} parent=1 // pred_check_branch
      %69 = sbr.rel (0) target = $region33
    $region32: #{tpu_custom_call.1} parent=1 // pred_region
      %70 = dma.done [#allocation3], 128
    $region33: #{tpu_custom_call.1} parent=1 // pred_fallthru
      _
    // Predicated region
    $region34: #{tpu_custom_call.1} parent=1 // pred_check
      _
    $region35: #{tpu_custom_call.1} parent=1 // pred_check_branch
      %72 = sbr.rel (0) target = $region37
    $region36: #{tpu_custom_call.1} parent=1 // pred_region
      %73 = dma.done [#allocation6], 256
    $region37: #{tpu_custom_call.1} parent=1 // pred_fallthru
      _
    // Predicated region
    $region38: #{tpu_custom_call.1} parent=1 // pred_check
      _
    $region39: #{tpu_custom_call.1} parent=1 // pred_check_branch
      %75 = sbr.rel (0) target = $region41
    $region40: #{tpu_custom_call.1} parent=1 // pred_region
      %76 = dma.done [#allocation6], 1024
    $region41: #{tpu_custom_call.1} parent=1 // pred_fallthru
      _
    // Predicated region
    $region42: #{tpu_custom_call.1} parent=1 // pred_check
      _
    $region43: #{tpu_custom_call.1} parent=1 // pred_check_branch
      %78 = sbr.rel (0) target = $region45
    $region44: #{tpu_custom_call.1} parent=1 // pred_region
      %79 = dma.done [#allocation9], 1024
    $region45: #{tpu_custom_call.1} parent=1 // pred_fallthru
      _
    %v81 = vld [vmem:[#allocation2] sm:$0xff]
    %v82 = vld [vmem:[#allocation5] sm:$0xf]
    %v83 = vld [vmem:[#allocation5 + $0x4] sm:$0xf]
    %v84 = vld [vmem:[#allocation5 + $0x8] sm:$0xf]
    %v85 = vld [vmem:[#allocation5 + $0xc] sm:$0xf]
    %v86 = vld [vmem:[%s2] sm:$0x1]
    %v87 = vpack.c.bf16 %v81, %v81
    %v89 = vlaneseq
    %v90 = vshrl.u32 %v89, 7
    %v91 = vsub.s32 0, %v90
    %v92 = vrot.slane %v86, %v91
    %v98 = vunpack.c.l.b16 %v82
    %v99 = vunpack.c.l.b16 %v83
    %v100 = vunpack.c.l.b16 %v84
    %v101 = vunpack.c.l.b16 %v85
    %v102 = vpack.c.b16 %v99, %v98
    %v103 = vpack.c.b16 %v101, %v100
    %vm106 = vcmask 261120
    %v108 = vsel %vm106, %v87, 0
    %110 = vmatprep.subr.bf16.mxu0 0
    %111 = vmatpush1.bf16.msra.mxu0 %v102
    %112 = vmatprep.subr.bf16.mxu0 0
    %113 = vmatpush1.bf16.msra.mxu0 %v103
    %114 = vmatprep.subr.bf16.mxu0 0
    %115 = vmatpush1.bf16.msra.mxu0 0
    %116 = vmatprep.subr.bf16.mxu0 0
    %117 = vmatpush1.bf16.msra.mxu0 0
    %118 = vmatprep.subr.bf16.mxu0 0
    %119 = vmatpush1.bf16.msra.mxu0 0
    %120 = vmatprep.subr.bf16.mxu0 0
    %121 = vmatpush1.bf16.msra.mxu0 0
    %122 = vmatprep.subr.bf16.mxu0 0
    %123 = vmatpush1.bf16.msra.mxu0 0
    %124 = vmatprep.subr.bf16.mxu0 0
    %125 = vmatpush1.bf16.msra.mxu0 0
    %126 = vmatprep.subr.bf16.mxu0 0
    %127 = vmatpush1.bf16.msra.mxu0 0
    %128 = vmatprep.subr.bf16.mxu0 0
    %129 = vmatpush1.bf16.msra.mxu0 0
    %130 = vmatprep.subr.bf16.mxu0 0
    %131 = vmatpush1.bf16.msra.mxu0 0
    %132 = vmatprep.subr.bf16.mxu0 0
    %133 = vmatpush1.bf16.msra.mxu0 0
    %134 = vmatprep.subr.bf16.mxu0 0
    %135 = vmatpush1.bf16.msra.mxu0 0
    %136 = vmatprep.subr.bf16.mxu0 0
    %137 = vmatpush1.bf16.msra.mxu0 0
    %138 = vmatprep.subr.bf16.mxu0 0
    %139 = vmatpush1.bf16.msra.mxu0 0
    %140 = vmatprep.subr.bf16.mxu0 0
    %141 = vmatpush1.bf16.msra.mxu0 0
    %142 = vmatprep.mubr.bf16.mxu0 0
    %143 = vmatmul.mubr.bf16.gmra.mrb[0].mxu0 %v108
    %v144 = vpop.f32.mrb[0].mxu0
    %v145 = vadd.f32 %v92, %v144
    %v146 = vpop.f32.mrb[0].mxu0
    %v147 = vpop.f32.mrb[0].mxu0
    %v148 = vpop.f32.mrb[0].mxu0
    %149 = vdwg.mxu0
    %v150 = vmax.f32 %v145, 0.0
    %v151 = vld [vmem:[#allocation7] sm:$0xf]
    %v152 = vld [vmem:[#allocation7 + $0x4] sm:$0xf]
    %v153 = vld [vmem:[#allocation7 + $0x8] sm:$0xf]
    %v154 = vld [vmem:[#allocation7 + $0xc] sm:$0xf]
    %v155 = vld [vmem:[#allocation7 + $0x10] sm:$0xf]
    %v156 = vld [vmem:[#allocation7 + $0x14] sm:$0xf]
    %v157 = vld [vmem:[#allocation7 + $0x18] sm:$0xf]
    %v158 = vld [vmem:[#allocation7 + $0x1c] sm:$0xf]
    %v159 = vld [vmem:[#allocation7 + $0x20] sm:$0xf]
    %v160 = vld [vmem:[#allocation7 + $0x24] sm:$0xf]
    %v161 = vld [vmem:[#allocation7 + $0x28] sm:$0xf]
    %v162 = vld [vmem:[#allocation7 + $0x2c] sm:$0xf]
    %v163 = vld [vmem:[#allocation7 + $0x30] sm:$0xf]
    %v164 = vld [vmem:[#allocation7 + $0x34] sm:$0xf]
    %v165 = vld [vmem:[#allocation7 + $0x38] sm:$0xf]
    %v166 = vld [vmem:[#allocation7 + $0x3c] sm:$0xf]
    %v167 = vld [vmem:[%s4] sm:$0x1]
    %v168 = vpack.c.bf16 %v150, %v150
    %v170 = vlaneseq
    %v171 = vshrl.u32 %v170, 7
    %v172 = vsub.s32 0, %v171
    %v173 = vrot.slane %v167, %v172
    %v191 = vunpack.c.l.b16 %v151
    %v192 = vunpack.c.l.b16 %v152
    %v193 = vunpack.c.l.b16 %v153
    %v194 = vunpack.c.l.b16 %v154
    %v195 = vunpack.c.l.b16 %v155
    %v196 = vunpack.c.l.b16 %v156
    %v197 = vunpack.c.l.b16 %v157
    %v198 = vunpack.c.l.b16 %v158
    %v199 = vunpack.c.l.b16 %v159
    %v200 = vunpack.c.l.b16 %v160
    %v201 = vunpack.c.l.b16 %v161
    %v202 = vunpack.c.l.b16 %v162
    %v203 = vunpack.c.l.b16 %v163
    %v204 = vunpack.c.l.b16 %v164
    %v205 = vunpack.c.l.b16 %v165
    %v206 = vunpack.c.l.b16 %v166
    %v207 = vpack.c.b16 %v192, %v191
    %v208 = vpack.c.b16 %v194, %v193
    %v209 = vpack.c.b16 %v196, %v195
    %v210 = vpack.c.b16 %v198, %v197
    %v211 = vpack.c.b16 %v200, %v199
    %v212 = vpack.c.b16 %v202, %v201
    %v213 = vpack.c.b16 %v204, %v203
    %v214 = vpack.c.b16 %v206, %v205
    %223 = vmatprep.subr.bf16.mxu0 0
    %224 = vmatpush1.bf16.msra.mxu0 %v207
    %225 = vmatprep.subr.bf16.mxu0 0
    %226 = vmatpush1.bf16.msra.mxu0 %v208
    %227 = vmatprep.subr.bf16.mxu0 0
    %228 = vmatpush1.bf16.msra.mxu0 %v209
    %229 = vmatprep.subr.bf16.mxu0 0
    %230 = vmatpush1.bf16.msra.mxu0 %v210
    %231 = vmatprep.subr.bf16.mxu0 0
    %232 = vmatpush1.bf16.msra.mxu0 %v211
    %233 = vmatprep.subr.bf16.mxu0 0
    %234 = vmatpush1.bf16.msra.mxu0 %v212
    %235 = vmatprep.subr.bf16.mxu0 0
    %236 = vmatpush1.bf16.msra.mxu0 %v213
    %237 = vmatprep.subr.bf16.mxu0 0
    %238 = vmatpush1.bf16.msra.mxu0 %v214
    %239 = vmatprep.subr.bf16.mxu0 0
    %240 = vmatpush1.bf16.msra.mxu0 0
    %241 = vmatprep.subr.bf16.mxu0 0
    %242 = vmatpush1.bf16.msra.mxu0 0
    %243 = vmatprep.subr.bf16.mxu0 0
    %244 = vmatpush1.bf16.msra.mxu0 0
    %245 = vmatprep.subr.bf16.mxu0 0
    %246 = vmatpush1.bf16.msra.mxu0 0
    %247 = vmatprep.subr.bf16.mxu0 0
    %248 = vmatpush1.bf16.msra.mxu0 0
    %249 = vmatprep.subr.bf16.mxu0 0
    %250 = vmatpush1.bf16.msra.mxu0 0
    %251 = vmatprep.subr.bf16.mxu0 0
    %252 = vmatpush1.bf16.msra.mxu0 0
    %253 = vmatprep.subr.bf16.mxu0 0
    %254 = vmatpush1.bf16.msra.mxu0 0
    %255 = vmatprep.mubr.bf16.mxu0 0
    %256 = vmatmul.mubr.bf16.gmra.mrb[0].mxu0 %v168
    %v257 = vpop.f32.mrb[0].mxu0
    %v258 = vadd.f32 %v173, %v257
    %v259 = vpop.f32.mrb[0].mxu0
    %v260 = vpop.f32.mrb[0].mxu0
    %v261 = vpop.f32.mrb[0].mxu0
    %262 = vdwg.mxu0
    %v263 = vmax.f32 %v258, 0.0
    %v264 = vld [vmem:[#allocation8] sm:$0xf]
    %v265 = vld [vmem:[#allocation8 + $0x4] sm:$0xf]
    %v266 = vld [vmem:[#allocation8 + $0x8] sm:$0xf]
    %v267 = vld [vmem:[#allocation8 + $0xc] sm:$0xf]
    %v268 = vld [vmem:[#allocation8 + $0x10] sm:$0xf]
    %v269 = vld [vmem:[#allocation8 + $0x14] sm:$0xf]
    %v270 = vld [vmem:[#allocation8 + $0x18] sm:$0xf]
    %v271 = vld [vmem:[#allocation8 + $0x1c] sm:$0xf]
    %v272 = vld [vmem:[#allocation8 + $0x20] sm:$0xf]
    %v273 = vld [vmem:[#allocation8 + $0x24] sm:$0xf]
    %v274 = vld [vmem:[#allocation8 + $0x28] sm:$0xf]
    %v275 = vld [vmem:[#allocation8 + $0x2c] sm:$0xf]
    %v276 = vld [vmem:[#allocation8 + $0x30] sm:$0xf]
    %v277 = vld [vmem:[#allocation8 + $0x34] sm:$0xf]
    %v278 = vld [vmem:[#allocation8 + $0x38] sm:$0xf]
    %v279 = vld [vmem:[#allocation8 + $0x3c] sm:$0xf]
    %v280 = vld [vmem:[%s6] sm:$0x1]
    %v281 = vpack.c.bf16 %v263, %v263
    %v283 = vlaneseq
    %v284 = vshrl.u32 %v283, 7
    %v285 = vsub.s32 0, %v284
    %v286 = vrot.slane %v280, %v285
    %v304 = vunpack.c.l.b16 %v264
    %v305 = vunpack.c.l.b16 %v265
    %v306 = vunpack.c.l.b16 %v266
    %v307 = vunpack.c.l.b16 %v267
    %v308 = vunpack.c.l.b16 %v268
    %v309 = vunpack.c.l.b16 %v269
    %v310 = vunpack.c.l.b16 %v270
    %v311 = vunpack.c.l.b16 %v271
    %v312 = vunpack.c.l.b16 %v272
    %v313 = vunpack.c.l.b16 %v273
    %v314 = vunpack.c.l.b16 %v274
    %v315 = vunpack.c.l.b16 %v275
    %v316 = vunpack.c.l.b16 %v276
    %v317 = vunpack.c.l.b16 %v277
    %v318 = vunpack.c.l.b16 %v278
    %v319 = vunpack.c.l.b16 %v279
    %v320 = vpack.c.b16 %v305, %v304
    %v321 = vpack.c.b16 %v307, %v306
    %v322 = vpack.c.b16 %v309, %v308
    %v323 = vpack.c.b16 %v311, %v310
    %v324 = vpack.c.b16 %v313, %v312
    %v325 = vpack.c.b16 %v315, %v314
    %v326 = vpack.c.b16 %v317, %v316
    %v327 = vpack.c.b16 %v319, %v318
    %336 = vmatprep.subr.bf16.mxu0 0
    %337 = vmatpush1.bf16.msra.mxu0 %v320
    %338 = vmatprep.subr.bf16.mxu0 0
    %339 = vmatpush1.bf16.msra.mxu0 %v321
    %340 = vmatprep.subr.bf16.mxu0 0
    %341 = vmatpush1.bf16.msra.mxu0 %v322
    %342 = vmatprep.subr.bf16.mxu0 0
    %343 = vmatpush1.bf16.msra.mxu0 %v323
    %344 = vmatprep.subr.bf16.mxu0 0
    %345 = vmatpush1.bf16.msra.mxu0 %v324
    %346 = vmatprep.subr.bf16.mxu0 0
    %347 = vmatpush1.bf16.msra.mxu0 %v325
    %348 = vmatprep.subr.bf16.mxu0 0
    %349 = vmatpush1.bf16.msra.mxu0 %v326
    %350 = vmatprep.subr.bf16.mxu0 0
    %351 = vmatpush1.bf16.msra.mxu0 %v327
    %352 = vmatprep.subr.bf16.mxu0 0
    %353 = vmatpush1.bf16.msra.mxu0 0
    %354 = vmatprep.subr.bf16.mxu0 0
    %355 = vmatpush1.bf16.msra.mxu0 0
    %356 = vmatprep.subr.bf16.mxu0 0
    %357 = vmatpush1.bf16.msra.mxu0 0
    %358 = vmatprep.subr.bf16.mxu0 0
    %359 = vmatpush1.bf16.msra.mxu0 0
    %360 = vmatprep.subr.bf16.mxu0 0
    %361 = vmatpush1.bf16.msra.mxu0 0
    %362 = vmatprep.subr.bf16.mxu0 0
    %363 = vmatpush1.bf16.msra.mxu0 0
    %364 = vmatprep.subr.bf16.mxu0 0
    %365 = vmatpush1.bf16.msra.mxu0 0
    %366 = vmatprep.subr.bf16.mxu0 0
    %367 = vmatpush1.bf16.msra.mxu0 0
    %368 = vmatprep.mubr.bf16.mxu0 0
    %369 = vmatmul.mubr.bf16.gmra.mrb[0].mxu0 %v281
    %v370 = vpop.f32.mrb[0].mxu0
    %v371 = vadd.f32 %v286, %v370
    %v372 = vpop.f32.mrb[0].mxu0
    %v373 = vpop.f32.mrb[0].mxu0
    %v374 = vpop.f32.mrb[0].mxu0
    %375 = vdwg.mxu0
    %376 = vst [vmem:[#allocation10] sm:$0xff] %v371
    // Predicated region
    $region46: #{tpu_custom_call.1} parent=1 // pred_check
      _
    $region47: #{tpu_custom_call.1} parent=1 // pred_check_branch
      %378 = sbr.rel (0) target = $region49
    $region48: #{tpu_custom_call.1} parent=1 // pred_region
      %s380 = ssub.s32 128, 128
      %381 = vsyncadd [#allocation4], %s380
      %s383 = sshll.u32 [#allocation10], 4
      %s384 = int_to_ptr.vmem [resolvable:$true] %s383
      %386 = dma.vmem_to_hbm [thread:$0]  %s384, 128, %s7, [#allocation4]
    $region49: #{tpu_custom_call.1} parent=1 // pred_fallthru
      _
    // Predicated region
    $region50: #{tpu_custom_call.1} parent=1 // pred_check
      _
    $region51: #{tpu_custom_call.1} parent=1 // pred_check_branch
      %388 = sbr.rel (0) target = $region53
    $region52: #{tpu_custom_call.1} parent=1 // pred_region
      %389 = dma.done [#allocation4], 128
    $region53: #{tpu_custom_call.1} parent=1 // pred_fallthru
      _
    %390 = vsyncpa [#allocation3], 1
    %391 = vsyncpa [#allocation6], 1
    %392 = vsyncpa [#allocation9], 1
    %393 = vsyncpa [#allocation4], 1

</llo_original>
